<compile_context>
chip_gen: v5e
topology: v5e:2x2
jax: 0.10.0
libtpu: 0.0.40
codegen_flags: <defaults>
</compile_context>

<pallas_src>
import functools

import jax
import jax.numpy as jnp
from jax import lax
from jax.experimental import pallas as pl
from jax.experimental.pallas import tpu as pltpu

LANES = 128


def _round_up(n, m):
    return ((n + m - 1) // m) * m


def _wbce_kernel(logits_ref, targets_ref, weights_ref, partial_ref, *,
                 ignore_index, bs, full_rows, rem, needs_mask):
    x = logits_ref[...].astype(jnp.float32)
    t = targets_ref[...].astype(jnp.float32)
    w = weights_ref[...].astype(jnp.float32)

    # Stable binary_cross_entropy_with_logits, reduction='none'.
    # exp/log1p run on the EUP slot; while HBM is the binding unit on
    # v5e/v6e/v7x this is free filler.
    bce = jnp.maximum(x, 0.0) - x * t + jnp.log1p(jnp.exp(-jnp.abs(x)))
    loss = bce * w
    if ignore_index is not None:
        loss = loss * (t != jnp.float32(ignore_index)).astype(jnp.float32)

    if needs_mask:
        # Ragged tail: the last grid block is partial and/or the last valid
        # lane-row is only partially populated.  Mask by global (row, lane)
        # position derived from STATIC counts (no SMEM/scalar prefetch needed).
        row = lax.broadcasted_iota(jnp.int32, (bs, LANES), 0)
        grow = pl.program_id(0) * bs + row
        valid = grow < full_rows
        if rem:
            lane = lax.broadcasted_iota(jnp.int32, (bs, LANES), 1)
            valid = valid | ((grow == full_rows) & (lane < rem))
        loss = jnp.where(valid, loss, 0.0)   # select: garbage NaNs can't leak

    # Lane-dense (8, 128) partial sum for this grid step (sublane-group adds
    # only; no cross-lane XLU reduce, no masked scalar store).  The serial add
    # chain here is hidden under the input DMAs (HBM-bound), so no two-stage
    # split is needed.
    if bs % 8 == 0:
        partial_ref[...] = jnp.sum(loss.reshape(bs // 8, 8, LANES), axis=0)
    else:
        # Tiny-input path (single full-extent block with bs == rows < 64).
        col = jnp.sum(loss, axis=0, keepdims=True)                # (1, 128)
        row8 = lax.broadcasted_iota(jnp.int32, (8, LANES), 0)
        partial_ref[...] = jnp.where(row8 == 0, col, jnp.float32(0.0))


def weighted_bce_with_logits(label_input, targets, weights, *,
                             ignore_index=-100, reduction='mean',
                             block_rows=4096):
    """All inputs share one shape (e.g. NCHW); any float/int dtypes.

    Returns a scalar float32 loss (reduction in {'mean', 'sum'}).
    """
    assert label_input.shape == targets.shape == weights.shape
    total_count = int(label_input.size)
    full_rows, rem = divmod(total_count, LANES)
    rows = full_rows + (1 if rem else 0)

    # ---- block-size selection -------------------------------------------
    #  * multiple of 32 sublanes -> valid tiling for f32 / bf16 / int8 inputs
    #  * >= 2 blocks whenever rows >= 64 so both v7x TensorCores get work
    #    under the ("parallel",) grid axis (single-TC v5e/v6e: harmless)
    #  * capped at block_rows (4096 rows = 2 MiB f32 per input block; 3 inputs
    #    double-buffered = 12 MiB, inside the 32 MiB scoped-VMEM limit below)
    if rows < 64:
        bs = rows                                  # full-extent block: legal
    else:
        bs = min(_round_up(block_rows, 32), _round_up(pl.cdiv(rows, 2), 32))
        bs = min(bs, (rows // 32) * 32)            # bs <= rows, multiple of 32
    num_blocks = pl.cdiv(rows, bs)
    needs_mask = (rows % bs != 0) or (rem != 0)

    # ---- lane-dense (rows, 128) slabs -------------------------------------
    # No padding to a multiple of the block size (partial edge blocks are
    # masked in-kernel).  Only remaining wrapper copy: a <128-element lane pad
    # when the element count is not 128-aligned.
    # TODO(synk): a 1-D-block variant could drop even that pad/copy.
    def to_slab(a):
        flat = a.reshape(-1)
        if rem:
            pad = rows * LANES - total_count
            flat = jnp.concatenate([flat, jnp.zeros((pad,), flat.dtype)])
        return flat.reshape(rows, LANES)

    x2, t2, w2 = to_slab(label_input), to_slab(targets), to_slab(weights)

    in_spec = pl.BlockSpec((bs, LANES), lambda i: (i, 0))
    ign = float(ignore_index) if ignore_index is not None else None

    partials = pl.pallas_call(
        functools.partial(_wbce_kernel, ignore_index=ign, bs=bs,
                          full_rows=full_rows, rem=rem, needs_mask=needs_mask),
        out_shape=jax.ShapeDtypeStruct((num_blocks * 8, LANES), jnp.float32),
        grid_spec=pltpu.PrefetchScalarGridSpec(
            num_scalar_prefetch=0,
            grid=(num_blocks,),
            in_specs=[in_spec, in_spec, in_spec],
            out_specs=pl.BlockSpec((8, LANES), lambda i: (i, 0)),
        ),
        compiler_params=pltpu.CompilerParams(
            dimension_semantics=("parallel",),
            vmem_limit_bytes=32 * 1024 * 1024),
    )(x2, t2, w2)

    total = jnp.sum(partials)
    if reduction == 'mean':
        # Matches torch .mean(): denominator counts ALL elements, including
        # ignore_index positions (they contribute 0 to the numerator).
        return total / jnp.float32(total_count)
    if reduction == 'sum':
        return total
    # TODO(synk): reduction='none' (per-element loss tensor) not implemented;
    # the module default is 'mean'.
    raise ValueError(f"unsupported reduction: {reduction}")


def _reference(label_input, targets, weights, ignore_index=-100):
    x = label_input.astype(jnp.float32)
    t = targets.astype(jnp.float32)
    w = weights.astype(jnp.float32)
    bce = jnp.maximum(x, 0.0) - x * t + jnp.log1p(jnp.exp(-jnp.abs(x)))
    loss = bce * w
    if ignore_index is not None:
        loss = loss * (t != ignore_index).astype(jnp.float32)
    return jnp.mean(loss)


def _make_inputs(key, shape, ignore_index=-100):
    k1, k2, k3, k4 = jax.random.split(key, 4)
    logits = jax.random.normal(k1, shape, dtype=jnp.float32)
    targets = (jax.random.uniform(k2, shape) > 0.5).astype(jnp.float32)
    ignore_mask = jax.random.uniform(k4, shape) < 0.1
    targets = jnp.where(ignore_mask, jnp.float32(ignore_index), targets)
    weights = jax.random.uniform(k3, shape, dtype=jnp.float32) + 0.5
    return logits, targets, weights


if __name__ == "__main__":
    key = jax.random.PRNGKey(0)
    k_a, k_b, k_c = jax.random.split(key, 3)

    # 1) NCHW f32, lane-aligned total (2*4*16*16 = 2048): single block.
    logits, targets, weights = _make_inputs(k_a, (2, 4, 16, 16))
    loss = jax.block_until_ready(
        weighted_bce_with_logits(logits, targets, weights))
    ref = _reference(logits, targets, weights)
    assert jnp.allclose(loss, ref, rtol=1e-5, atol=1e-6), (loss, ref)

    # 2) Ragged total (2*3*17*13 = 1326): exercises in-kernel lane-tail mask.
    logits2, targets2, weights2 = _make_inputs(k_b, (2, 3, 17, 13))
    loss2 = jax.block_until_ready(
        weighted_bce_with_logits(logits2, targets2, weights2))
    ref2 = _reference(logits2, targets2, weights2)
    assert jnp.allclose(loss2, ref2, rtol=1e-5, atol=1e-6), (loss2, ref2)

    # 3) Narrow dtypes (bf16 logits/weights, int8 targets), 2 grid blocks.
    l3, t3, w3 = _make_inputs(k_c, (2, 4, 32, 32))
    l3 = l3.astype(jnp.bfloat16)
    w3 = w3.astype(jnp.bfloat16)
    t3 = t3.astype(jnp.int8)            # values {0, 1, -100}: exact in int8
    loss3 = jax.block_until_ready(weighted_bce_with_logits(l3, t3, w3))
    ref3 = _reference(l3, t3, w3)
    assert jnp.allclose(loss3, ref3, rtol=1e-4, atol=1e-5), (loss3, ref3)

    print("KERNEL_OK")
</pallas_src>

<mosaic_0001>
module attributes {stable_mosaic.version = 11 : i64} {
  func.func @_wbce_kernel(%arg0: i32, %arg1: memref<16x128xf32, #tpu.memory_space<vmem>>, %arg2: memref<16x128xf32, #tpu.memory_space<vmem>>, %arg3: memref<16x128xf32, #tpu.memory_space<vmem>>, %arg4: memref<8x128xf32, #tpu.memory_space<vmem>>) attributes {dimension_semantics = [#tpu.dimension_semantics<parallel>], iteration_bounds = array<i64: 1>, scalar_prefetch = 0 : i64, scratch_operands = 0 : i64, tpu.core_type = #tpu.core_type<tc>, window_params = [{transform_indices = @transform_0, window_bounds = array<i64: 16, 128>}, {transform_indices = @transform_1, window_bounds = array<i64: 16, 128>}, {transform_indices = @transform_2, window_bounds = array<i64: 16, 128>}, {transform_indices = @transform_3, window_bounds = array<i64: 8, 128>}]} {
    %c0 = arith.constant 0 : index
    %c0_0 = arith.constant 0 : index
    %0 = vector.load %arg1[%c0, %c0_0] : memref<16x128xf32, #tpu.memory_space<vmem>>, vector<16x128xf32>
    %c0_1 = arith.constant 0 : index
    %c0_2 = arith.constant 0 : index
    %1 = vector.load %arg2[%c0_1, %c0_2] : memref<16x128xf32, #tpu.memory_space<vmem>>, vector<16x128xf32>
    %c0_3 = arith.constant 0 : index
    %c0_4 = arith.constant 0 : index
    %2 = vector.load %arg3[%c0_3, %c0_4] : memref<16x128xf32, #tpu.memory_space<vmem>>, vector<16x128xf32>
    %cst = arith.constant 0.000000e+00 : f32
    %3 = vector.broadcast %cst : f32 to vector<16x128xf32>
    %4 = arith.maximumf %0, %3 : vector<16x128xf32>
    %5 = arith.mulf %0, %1 : vector<16x128xf32>
    %6 = arith.subf %4, %5 : vector<16x128xf32>
    %7 = math.absf %0 : vector<16x128xf32>
    %cst_5 = arith.constant 0.000000e+00 : f32
    %8 = vector.broadcast %cst_5 : f32 to vector<16x128xf32>
    %9 = arith.subf %8, %7 : vector<16x128xf32>
    %10 = math.exp %9 : vector<16x128xf32>
    %11 = math.log1p %10 : vector<16x128xf32>
    %12 = arith.addf %6, %11 : vector<16x128xf32>
    %13 = arith.mulf %12, %2 : vector<16x128xf32>
    %cst_6 = arith.constant -1.000000e+02 : f32
    %14 = vector.broadcast %cst_6 : f32 to vector<16x128xf32>
    %15 = arith.cmpf one, %1, %14 : vector<16x128xf32>
    %16 = arith.extui %15 : vector<16x128xi1> to vector<16x128xi32>
    %17 = arith.sitofp %16 : vector<16x128xi32> to vector<16x128xf32>
    %18 = arith.mulf %13, %17 : vector<16x128xf32>
    %19 = vector.shape_cast %18 : vector<16x128xf32> to vector<2x8x128xf32>
    %cst_7 = arith.constant dense<0.000000e+00> : vector<8x128xf32>
    %20 = vector.multi_reduction <add>, %19, %cst_7 [0] : vector<2x8x128xf32> to vector<8x128xf32>
    %c0_8 = arith.constant 0 : index
    %c0_9 = arith.constant 0 : index
    %21 = vector.load %arg4[%c0_8, %c0_9] : memref<8x128xf32, #tpu.memory_space<vmem>>, vector<8x128xf32>
    tpu.vector_store %arg4[%c0_8, %c0_9], %20 {strides = array<i32>} : memref<8x128xf32, #tpu.memory_space<vmem>>, vector<8x128xf32>,
    return
  }
  func.func @transform_0(%arg0: i32) -> (i32, i32) {
    %c0_i32 = arith.constant 0 : i32
    %c0_i32_0 = arith.constant 0 : i32
    return %arg0, %c0_i32 : i32, i32
  }
  func.func @transform_1(%arg0: i32) -> (i32, i32) {
    %c0_i32 = arith.constant 0 : i32
    %c0_i32_0 = arith.constant 0 : i32
    return %arg0, %c0_i32 : i32, i32
  }
  func.func @transform_2(%arg0: i32) -> (i32, i32) {
    %c0_i32 = arith.constant 0 : i32
    %c0_i32_0 = arith.constant 0 : i32
    return %arg0, %c0_i32 : i32, i32
  }
  func.func @transform_3(%arg0: i32) -> (i32, i32) {
    %c0_i32 = arith.constant 0 : i32
    %c0_i32_0 = arith.constant 0 : i32
    return %arg0, %c0_i32 : i32, i32
  }
}

</mosaic_0001>

<llo_original>
// kernel: tpu_custom_call.1
$region0: #{tpu_custom_call.1}
  #allocation0 [shape = 'u32[]', space=smem, size = 0x4, offset = 0x4, fixed_abs, tag = 'smem constant byte address 0x4 - core index']
  #allocation1 [shape = 'u32[72,128]{1,0:T(1,128)}', space=vmem, size = 0x9000, scoped, tag = 'internal scratch']
  %s0 = inlined_call_operand.hbm [shape: f32[16,128], index: 0, kind: input, shape index: {}]
  %s1 = inlined_call_operand.hbm [shape: f32[16,128], index: 1, kind: input, shape index: {}]
  %s2 = inlined_call_operand.hbm [shape: f32[16,128], index: 2, kind: input, shape index: {}]
  %s3 = inlined_call_operand.hbm [shape: f32[8,128], index: 3, kind: output, shape index: {}]
  %s4 = sld [smem:[#allocation0]]
  $region34: #{tpu_custom_call.1} parent=0
    _
  %s6 = ssub.s32 1, %s4
  %s7 = scalar_select 0, %s6, %s4
  $region1: #{tpu_custom_call.1} parent=0
    #allocation2 [shape = 'u8[8192]{0}', space=vmem, size = 0x2000, scoped, tag = 'input window, operand 0, single buffered']
    #allocation3 [shape = 's32[1]{0}', space=sflag, size = 0x4, scoped, tag = 'scoped memory for tpu_custom_call.1']
    #allocation4 [shape = 's32[1]{0}', space=sflag, size = 0x4, scoped, tag = 'scoped memory for tpu_custom_call.1']
    #allocation5 [shape = 'u8[8192]{0}', space=vmem, size = 0x2000, scoped, tag = 'input window, operand 1, single buffered']
    #allocation6 [shape = 's32[1]{0}', space=sflag, size = 0x4, scoped, tag = 'scoped memory for tpu_custom_call.1']
    #allocation7 [shape = 'u8[8192]{0}', space=vmem, size = 0x2000, scoped, tag = 'input window, operand 2, single buffered']
    #allocation8 [shape = 'u8[4096]{0}', space=vmem, size = 0x1000, scoped, tag = 'output window, operand 0, single buffered']
    %8 = vsyncpa [#allocation3], 0
    %9 = vsyncpa [#allocation6], 0
    %10 = vsyncpa [#allocation4], 0
    // Predicated region
    $region2: #{tpu_custom_call.1} parent=1 // pred_check
      _
    $region3: #{tpu_custom_call.1} parent=1 // pred_check_branch
      %12 = sbr.rel (0) target = $region5
    $region4: #{tpu_custom_call.1} parent=1 // pred_region
      %14 = vsyncadd [#allocation3], 0
      %s15 = sshll.u32 %s0, 4
      %s16 = int_to_ptr.hbm [resolvable:$true] %s15
      %s17 = sshll.u32 [#allocation2], 4
      %s18 = int_to_ptr.vmem [resolvable:$true] %s17
      %23 = dma.hbm_to_vmem [thread:$0]  %s16, 256, %s18, [#allocation3], 128, 128, 8
    $region5: #{tpu_custom_call.1} parent=1 // pred_fallthru
      _
    // Predicated region
    $region6: #{tpu_custom_call.1} parent=1 // pred_check
      _
    $region7: #{tpu_custom_call.1} parent=1 // pred_check_branch
      %25 = sbr.rel (0) target = $region9
    $region8: #{tpu_custom_call.1} parent=1 // pred_region
      %27 = vsyncadd [#allocation6], 0
      %s28 = sshll.u32 %s1, 4
      %s29 = int_to_ptr.hbm [resolvable:$true] %s28
      %s30 = sshll.u32 [#allocation5], 4
      %s31 = int_to_ptr.vmem [resolvable:$true] %s30
      %36 = dma.hbm_to_vmem [thread:$0]  %s29, 256, %s31, [#allocation6], 128, 128, 8
    $region9: #{tpu_custom_call.1} parent=1 // pred_fallthru
      _
    // Predicated region
    $region10: #{tpu_custom_call.1} parent=1 // pred_check
      _
    $region11: #{tpu_custom_call.1} parent=1 // pred_check_branch
      %38 = sbr.rel (0) target = $region13
    $region12: #{tpu_custom_call.1} parent=1 // pred_region
      %40 = vsyncadd [#allocation6], 0
      %s41 = sshll.u32 %s2, 4
      %s42 = int_to_ptr.hbm [resolvable:$true] %s41
      %s43 = sshll.u32 [#allocation7], 4
      %s44 = int_to_ptr.vmem [resolvable:$true] %s43
      %49 = dma.hbm_to_vmem [thread:$0]  %s42, 256, %s44, [#allocation6], 128, 128, 8
    $region13: #{tpu_custom_call.1} parent=1 // pred_fallthru
      _
    // Predicated region
    $region14: #{tpu_custom_call.1} parent=1 // pred_check
      _
    $region15: #{tpu_custom_call.1} parent=1 // pred_check_branch
      %51 = sbr.rel (0) target = $region17
    $region16: #{tpu_custom_call.1} parent=1 // pred_region
      %53 = dma.done [#allocation3], 256
    $region17: #{tpu_custom_call.1} parent=1 // pred_fallthru
      _
    // Predicated region
    $region18: #{tpu_custom_call.1} parent=1 // pred_check
      _
    $region19: #{tpu_custom_call.1} parent=1 // pred_check_branch
      %55 = sbr.rel (0) target = $region21
    $region20: #{tpu_custom_call.1} parent=1 // pred_region
      %57 = dma.done [#allocation6], 256
    $region21: #{tpu_custom_call.1} parent=1 // pred_fallthru
      _
    // Predicated region
    $region22: #{tpu_custom_call.1} parent=1 // pred_check
      _
    $region23: #{tpu_custom_call.1} parent=1 // pred_check_branch
      %59 = sbr.rel (0) target = $region25
    $region24: #{tpu_custom_call.1} parent=1 // pred_region
      %61 = dma.done [#allocation6], 256
    $region25: #{tpu_custom_call.1} parent=1 // pred_fallthru
      _
    %v62 = vld [vmem:[#allocation2] sm:$0xff]
    %v63 = vld [vmem:[#allocation2 + $0x8] sm:$0xff]
    %v64 = vld [vmem:[#allocation5] sm:$0xff]
    %v65 = vld [vmem:[#allocation5 + $0x8] sm:$0xff]
    %v66 = vld [vmem:[#allocation7] sm:$0xff]
    %v67 = vld [vmem:[#allocation7 + $0x8] sm:$0xff]
    %v68 = vmax.f32 %v62, 0.0
    %v69 = vmax.f32 %v63, 0.0
    %v70 = vmul.f32 %v62, %v64
    %v71 = vmul.f32 %v63, %v65
    %v72 = vsub.f32 %v68, %v70
    %v73 = vsub.f32 %v69, %v71
    %v74 = vand.u32 2147483647, %v62
    %v75 = vand.u32 2147483647, %v63
    %v76 = vsub.f32 0.0, %v74
    %v77 = vsub.f32 0.0, %v75
    %v78 = vmul.f32 %v76, 1.442695
    %v79 = vpow.pop %v78
    %v80 = vmul.f32 %v77, 1.442695
    %v81 = vpow.pop %v80
    %v82 = vadd.f32 %v79, 1.0
    %v83 = vlog2.pop %v82
    %v84 = vmul.f32 %v83, 0.6931472
    %v85 = vmul.f32 -0.5, %v79
    %v86 = vadd.f32 %v85, 1.0
    %v87 = vmul.f32 %v86, %v79
    %v88 = vand.u32 2147483647, %v79
    %vm89 = vcmp.lt.f32.partialorder %v88, 0.0004427343
    %v90 = vsel %vm89, %v87, %v84
    %v91 = vadd.f32 %v81, 1.0
    %v92 = vlog2.pop %v91
    %v93 = vmul.f32 %v92, 0.6931472
    %v94 = vmul.f32 -0.5, %v81
    %v95 = vadd.f32 %v94, 1.0
    %v96 = vmul.f32 %v95, %v81
    %v97 = vand.u32 2147483647, %v81
    %vm98 = vcmp.lt.f32.partialorder %v97, 0.0004427343
    %v99 = vsel %vm98, %v96, %v93
    %v100 = vadd.f32 %v72, %v90
    %v101 = vadd.f32 %v73, %v99
    %v102 = vmul.f32 %v100, %v66
    %v103 = vmul.f32 %v101, %v67
    %vm104 = vcmp.ne.f32.partialorder %v64, -100.0
    %vm105 = vcmp.ne.f32.partialorder %v65, -100.0
    %v106 = vsel %vm104, 1, 0
    %v107 = vsel %vm105, 1, 0
    %v108 = vcvt.s32.f32 %v106
    %v109 = vcvt.s32.f32 %v107
    %v110 = vmul.f32 %v102, %v108
    %v111 = vmul.f32 %v103, %v109
    %v112 = vadd.f32 %v110, %v111
    %113 = vst [vmem:[#allocation8] sm:$0xff] %v112
    // Predicated region
    $region26: #{tpu_custom_call.1} parent=1 // pred_check
      _
    $region27: #{tpu_custom_call.1} parent=1 // pred_check_branch
      %115 = sbr.rel (0) target = $region29
    $region28: #{tpu_custom_call.1} parent=1 // pred_region
      %117 = vsyncadd [#allocation4], 0
      %s119 = sshll.u32 [#allocation8], 4
      %s120 = int_to_ptr.vmem [resolvable:$true] %s119
      %s121 = sshll.u32 %s3, 4
      %s122 = int_to_ptr.hbm [resolvable:$true] %s121
      %124 = dma.vmem_to_hbm [thread:$0]  %s120, 128, %s122, [#allocation4]
    $region29: #{tpu_custom_call.1} parent=1 // pred_fallthru
      _
    // Predicated region
    $region30: #{tpu_custom_call.1} parent=1 // pred_check
      _
    $region31: #{tpu_custom_call.1} parent=1 // pred_check_branch
      %126 = sbr.rel (0) target = $region33
    $region32: #{tpu_custom_call.1} parent=1 // pred_region
      %128 = dma.done [#allocation4], 128
    $region33: #{tpu_custom_call.1} parent=1 // pred_fallthru
      _
    %129 = vsyncpa [#allocation3], 1
    %130 = vsyncpa [#allocation6], 1
    %131 = vsyncpa [#allocation4], 1

</llo_original>
